<compile_context>
chip_gen: v5e
topology: v5e:2x2
jax: 0.10.0
libtpu: 0.0.40
codegen_flags: <defaults>
</compile_context>

<pallas_src>
import functools

import jax
import jax.numpy as jnp
from jax import lax
from jax.experimental import pallas as pl
from jax.experimental.pallas import tpu as pltpu


def mhsa_kernel(x_ref, w_ref, b_ref, out_ref, qkv_ref, *,
                heads, bb, n_valid, dyn_head_loop):
    """One grid step: `bb` batch elements, all heads.

    x_ref   : (C, bb*Np)  bf16  lane-major activations (padded spatial on lanes)
    w_ref   : (3C, C)     bf16  fused [wq; wk; wv]
    b_ref   : (3C, 1)     f32   fused [bq; bk; bv]
    out_ref : (C, bb*Np)  bf16
    qkv_ref : (3C, bb*Np) bf16  VMEM scratch holding the fused projection
    """
    C = w_ref.shape[1]
    dhead = C // heads
    Np = x_ref.shape[1] // bb

    # Fused Q/K/V projection for all heads and all bb batch elements in this step:
    # a single (3C, C) @ (C, bb*Np) MXU matmul, bf16 feeds, f32 accumulation.
    qkv = jnp.dot(w_ref[...], x_ref[...], preferred_element_type=jnp.float32)
    qkv_ref[...] = (qkv + b_ref[...]).astype(jnp.bfloat16)

    # Rank-1 additive key-padding mask (keys live on the sublane axis of the
    # transposed energy below): 0 for valid keys, -1e30 for padded ones.
    if n_valid < Np:
        key_mask = jnp.where(
            lax.broadcasted_iota(jnp.int32, (Np, 1), 0) >= n_valid,
            jnp.float32(-1e30), jnp.float32(0.0))
    else:
        key_mask = None

    def one_head(lane_off, q_off, k_off, v_off, o_off):
        qh = qkv_ref[pl.ds(q_off, dhead), pl.ds(lane_off, Np)]   # (dhead, Np) bf16
        kh = qkv_ref[pl.ds(k_off, dhead), pl.ds(lane_off, Np)]
        vh = qkv_ref[pl.ds(v_off, dhead), pl.ds(lane_off, Np)]

        # Transposed energy: e[j, i] = sum_d k[d, j] * q[d, i]  (keys j on
        # sublanes, queries i on lanes).  Softmax over keys -> sublane reductions
        # that land directly in a (1, Np) row, which broadcasts over the
        # (dhead, Np) output for free.
        e = lax.dot_general(kh, qh, (((0,), (0,)), ((), ())),
                            preferred_element_type=jnp.float32)   # (Np, Np) f32
        if key_mask is not None:
            e = e + key_mask                                       # rank-1 add, no Np^2 select
        e = e - jnp.max(e, axis=0, keepdims=True)                  # (1, Np) per-query max
        p = jnp.exp(e)
        l = jnp.sum(p, axis=0, keepdims=True)                      # (1, Np) denominator

        # Deferred normalization: multiply the *unnormalized* probabilities into V
        # and rescale the small (dhead, Np) result (dhead*Np instead of Np^2 muls).
        o = jnp.dot(vh, p.astype(jnp.bfloat16),
                    preferred_element_type=jnp.float32)            # (dhead, Np) f32
        o = o * pl.reciprocal(l, approx=True)                      # EUP reciprocal
        out_ref[pl.ds(o_off, dhead), pl.ds(lane_off, Np)] = o.astype(out_ref.dtype)

    for b in range(bb):                      # bb is small & static
        lane_off = b * Np
        if dyn_head_loop:
            # fori_loop bounds live ranges: only one head's (Np, Np) temporaries
            # are live at a time (keeps v7x's 64 MiB VMEM happy at large Np).
            def body(h, carry):
                off = pl.multiple_of(h * dhead, dhead)
                one_head(lane_off,
                         off,
                         pl.multiple_of(C + h * dhead, dhead),
                         pl.multiple_of(2 * C + h * dhead, dhead),
                         off)
                return carry
            lax.fori_loop(0, heads, body, 0)
        else:
            for h in range(heads):
                one_head(lane_off, h * dhead, C + h * dhead,
                         2 * C + h * dhead, h * dhead)


def _pick_batch_block(B, Np, lane_budget=2048, min_steps=2):
    """Largest divisor Bb of B with Bb*Np <= lane_budget that still leaves at
    least `min_steps` grid steps when B >= min_steps (keeps both v7x TCs fed)."""
    best = 1
    for bb in range(1, B + 1):
        if B % bb:
            continue
        if bb * Np > lane_budget:
            continue
        if B >= min_steps and (B // bb) < min_steps:
            continue
        best = bb
    return best


def fuse_mhsa_params(params):
    """One-time parameter prep: fuse the three 1x1-conv weights/biases."""
    C = params["wq"].shape[0]
    w_qkv = jnp.concatenate([params["wq"], params["wk"], params["wv"]],
                            axis=0).astype(jnp.bfloat16)               # (3C, C)
    b_qkv = jnp.concatenate([params["bq"], params["bk"], params["bv"]],
                            axis=0).reshape(3 * C, 1).astype(jnp.float32)
    return {"w_qkv": w_qkv, "b_qkv": b_qkv}


def mhsa_forward(x, fused_params, heads):
    """x: (B, C, W, H) float32.  fused_params: output of fuse_mhsa_params."""
    B, C, W, H = x.shape
    assert C % heads == 0
    dhead = C // heads
    N = W * H

    # Pad the spatial (lane) dim up to a multiple of 128.
    Np = max(128, ((N + 127) // 128) * 128)
    x_flat = x.reshape(B, C, N)
    if Np != N:
        x_flat = jnp.pad(x_flat, ((0, 0), (0, 0), (0, Np - N)))
    # (B, C, Np) -> (C, B*Np): lane-major layout, so each grid step sees one
    # lane-dense (C, Bb*Np) slab and the QKV projection is one wide MXU matmul.
    x_lanes = jnp.transpose(x_flat, (1, 0, 2)).reshape(C, B * Np).astype(jnp.bfloat16)

    Bb = _pick_batch_block(B, Np)
    steps = B // Bb
    dyn_head_loop = (Np >= 256) and (dhead % 8 == 0) and (heads > 1)

    kernel = functools.partial(mhsa_kernel, heads=heads, bb=Bb,
                               n_valid=N, dyn_head_loop=dyn_head_loop)

    out = pl.pallas_call(
        kernel,
        out_shape=jax.ShapeDtypeStruct((C, B * Np), jnp.bfloat16),
        grid_spec=pltpu.PrefetchScalarGridSpec(
            num_scalar_prefetch=0,
            grid=(steps,),
            in_specs=[
                pl.BlockSpec((C, Bb * Np), lambda s: (0, s)),
                pl.BlockSpec((3 * C, C), lambda s: (0, 0)),
                pl.BlockSpec((3 * C, 1), lambda s: (0, 0)),
            ],
            out_specs=pl.BlockSpec((C, Bb * Np), lambda s: (0, s)),
            scratch_shapes=[pltpu.VMEM((3 * C, Bb * Np), jnp.bfloat16)],
        ),
        compiler_params=pltpu.CompilerParams(
            dimension_semantics=("parallel",),
            vmem_limit_bytes=32 * 1024 * 1024,
        ),
    )(x_lanes, fused_params["w_qkv"], fused_params["b_qkv"])

    # Drop spatial padding, restore NCHW (matches torch out.view(n_batch, C, W, H)),
    # cast back to the input dtype (kernel emits bf16 to halve writeback).
    out = out.reshape(C, B, Np)[:, :, :N]
    out = jnp.transpose(out, (1, 0, 2)).astype(x.dtype).reshape(B, C, W, H)
    return out


def mhsa_reference(x, params, heads):
    """Plain-JAX f32 reference mirroring the PyTorch forward (pos_emb=False)."""
    B, C, W, H = x.shape
    N = W * H
    dhead = C // heads
    xf = x.reshape(B, C, N)

    def proj(w, b):
        y = jnp.einsum("oc,bcn->bon", w, xf) + b[None, :, None]
        return y.reshape(B, heads, dhead, N)

    q = proj(params["wq"], params["bq"])
    k = proj(params["wk"], params["bk"])
    v = proj(params["wv"], params["bv"])
    energy = jnp.einsum("bhdi,bhdj->bhij", q, k)
    attn = jax.nn.softmax(energy, axis=-1)
    out = jnp.einsum("bhdj,bhij->bhdi", v, attn)
    return out.reshape(B, C, W, H)


def _run_case(key, B, C, W, H, heads):
    kx, k1, k2, k3, k4, k5, k6 = jax.random.split(key, 7)
    x = jax.random.normal(kx, (B, C, W, H), dtype=jnp.float32)
    params = {
        "wq": jax.random.normal(k1, (C, C), dtype=jnp.float32) * 0.1,
        "bq": jax.random.normal(k2, (C,), dtype=jnp.float32) * 0.1,
        "wk": jax.random.normal(k3, (C, C), dtype=jnp.float32) * 0.1,
        "bk": jax.random.normal(k4, (C,), dtype=jnp.float32) * 0.1,
        "wv": jax.random.normal(k5, (C, C), dtype=jnp.float32) * 0.1,
        "bv": jax.random.normal(k6, (C,), dtype=jnp.float32) * 0.1,
    }
    fused = fuse_mhsa_params(params)
    out = jax.block_until_ready(mhsa_forward(x, fused, heads))
    ref = mhsa_reference(x, params, heads)
    assert out.shape == (B, C, W, H)
    # bf16 MXU feeds + bf16 output + approx reciprocal vs. an all-f32 reference.
    assert jnp.allclose(out, ref, atol=2e-2, rtol=2e-2), \
        f"mismatch vs reference for shape {(B, C, W, H)}"


if __name__ == "__main__":
    key = jax.random.PRNGKey(0)
    k1, k2 = jax.random.split(key)
    # Case 1: small shape — static unrolled head loop, dhead=4, Bb=1, padded N.
    _run_case(k1, B=2, C=16, W=8, H=8, heads=4)
    # Case 2: larger spatial — Bb=2 batch packing, fori_loop head path (dhead=8),
    # padded N (576 -> 640) exercising the rank-1 key mask.
    _run_case(k2, B=4, C=32, W=24, H=24, heads=4)
    print("KERNEL_OK")
</pallas_src>

<mosaic_0001>
module attributes {stable_mosaic.version = 11 : i64} {
  func.func @mhsa_kernel(%arg0: i32, %arg1: memref<16x128xbf16, #tpu.memory_space<vmem>>, %arg2: memref<48x16xbf16, #tpu.memory_space<vmem>>, %arg3: memref<48x1xf32, #tpu.memory_space<vmem>>, %arg4: memref<16x128xbf16, #tpu.memory_space<vmem>>, %arg5: memref<48x128xbf16, #tpu.memory_space<vmem>>) attributes {dimension_semantics = [#tpu.dimension_semantics<parallel>], iteration_bounds = array<i64: 2>, scalar_prefetch = 0 : i64, scratch_operands = 1 : i64, tpu.core_type = #tpu.core_type<tc>, window_params = [{transform_indices = @transform_0, window_bounds = array<i64: 16, 128>}, {pipeline_mode = #tpu.pipeline_mode<synchronous>, transform_indices = @transform_1, window_bounds = array<i64: 48, 16>}, {pipeline_mode = #tpu.pipeline_mode<synchronous>, transform_indices = @transform_2, window_bounds = array<i64: 48, 1>}, {transform_indices = @transform_3, window_bounds = array<i64: 16, 128>}]} {
    %c0 = arith.constant 0 : index
    %c0_0 = arith.constant 0 : index
    %0 = vector.load %arg2[%c0, %c0_0] : memref<48x16xbf16, #tpu.memory_space<vmem>>, vector<48x16xbf16>
    %c0_1 = arith.constant 0 : index
    %c0_2 = arith.constant 0 : index
    %1 = vector.load %arg1[%c0_1, %c0_2] : memref<16x128xbf16, #tpu.memory_space<vmem>>, vector<16x128xbf16>
    %cst = arith.constant dense<0.000000e+00> : vector<48x128xf32>
    %2 = tpu.matmul %0, %1, %cst {dimension_numbers = #tpu.dot_dimension_numbers<[1], [0], [0], [1], [0, 0, 1, 1], [], []>} : vector<48x16xbf16>, vector<16x128xbf16>, vector<48x128xf32> -> vector<48x128xf32>
    %c0_3 = arith.constant 0 : index
    %c0_4 = arith.constant 0 : index
    %3 = vector.load %arg3[%c0_3, %c0_4] : memref<48x1xf32, #tpu.memory_space<vmem>>, vector<48x1xf32>
    %4 = vector.broadcast %3 : vector<48x1xf32> to vector<48x128xf32>
    %5 = arith.addf %2, %4 : vector<48x128xf32>
    %6 = arith.truncf %5 : vector<48x128xf32> to vector<48x128xbf16>
    %c0_5 = arith.constant 0 : index
    %c0_6 = arith.constant 0 : index
    %7 = vector.load %arg5[%c0_5, %c0_6] : memref<48x128xbf16, #tpu.memory_space<vmem>>, vector<48x128xbf16>
    tpu.vector_store %arg5[%c0_5, %c0_6], %6 {strides = array<i32>} : memref<48x128xbf16, #tpu.memory_space<vmem>>, vector<48x128xbf16>,
    %8 = tpu.iota {dimensions = array<i32: 0>} : vector<128x1xi32>
    %c64_i32 = arith.constant 64 : i32
    %9 = vector.broadcast %c64_i32 : i32 to vector<128x1xi32>
    %10 = arith.cmpi sge, %8, %9 : vector<128x1xi32>
    %cst_7 = arith.constant -1.000000e+30 : f32
    %cst_8 = arith.constant 0.000000e+00 : f32
    %11 = vector.broadcast %cst_7 : f32 to vector<128x1xf32>
    %12 = vector.broadcast %cst_8 : f32 to vector<128x1xf32>
    %13 = arith.select %10, %11, %12 : vector<128x1xi1>, vector<128x1xf32>
    %c0_9 = arith.constant 0 : index
    %c0_10 = arith.constant 0 : index
    %14 = vector.load %arg5[%c0_9, %c0_10] : memref<48x128xbf16, #tpu.memory_space<vmem>>, vector<4x128xbf16>
    %c16 = arith.constant 16 : index
    %c0_11 = arith.constant 0 : index
    %15 = vector.load %arg5[%c16, %c0_11] : memref<48x128xbf16, #tpu.memory_space<vmem>>, vector<4x128xbf16>
    %c32 = arith.constant 32 : index
    %c0_12 = arith.constant 0 : index
    %16 = vector.load %arg5[%c32, %c0_12] : memref<48x128xbf16, #tpu.memory_space<vmem>>, vector<4x128xbf16>
    %cst_13 = arith.constant dense<0.000000e+00> : vector<128x128xf32>
    %17 = tpu.matmul %15, %14, %cst_13 {dimension_numbers = #tpu.dot_dimension_numbers<[0], [0], [1], [1], [0, 1, 1, 1], [], []>} : vector<4x128xbf16>, vector<4x128xbf16>, vector<128x128xf32> -> vector<128x128xf32>
    %18 = vector.broadcast %13 : vector<128x1xf32> to vector<128x128xf32>
    %19 = arith.addf %17, %18 : vector<128x128xf32>
    %cst_14 = arith.constant dense<0xFF800000> : vector<128xf32>
    %20 = vector.multi_reduction <maximumf>, %19, %cst_14 [0] : vector<128x128xf32> to vector<128xf32>
    %21 = vector.shape_cast %20 : vector<128xf32> to vector<1x128xf32>
    %22 = vector.broadcast %21 : vector<1x128xf32> to vector<128x128xf32>
    %23 = arith.subf %19, %22 : vector<128x128xf32>
    %24 = math.exp %23 : vector<128x128xf32>
    %cst_15 = arith.constant dense<0.000000e+00> : vector<128xf32>
    %25 = vector.multi_reduction <add>, %24, %cst_15 [0] : vector<128x128xf32> to vector<128xf32>
    %26 = vector.shape_cast %25 : vector<128xf32> to vector<1x128xf32>
    %27 = arith.truncf %24 : vector<128x128xf32> to vector<128x128xbf16>
    %cst_16 = arith.constant dense<0.000000e+00> : vector<4x128xf32>
    %28 = tpu.matmul %16, %27, %cst_16 {dimension_numbers = #tpu.dot_dimension_numbers<[1], [0], [0], [1], [0, 0, 1, 1], [], []>} : vector<4x128xbf16>, vector<128x128xbf16>, vector<4x128xf32> -> vector<4x128xf32>
    %29 = tpu.reciprocal %26 {approx = true} : vector<1x128xf32> -> vector<1x128xf32>
    %30 = vector.broadcast %29 : vector<1x128xf32> to vector<4x128xf32>
    %31 = arith.mulf %28, %30 : vector<4x128xf32>
    %32 = arith.truncf %31 : vector<4x128xf32> to vector<4x128xbf16>
    %c0_17 = arith.constant 0 : index
    %c0_18 = arith.constant 0 : index
    %33 = vector.load %arg4[%c0_17, %c0_18] : memref<16x128xbf16, #tpu.memory_space<vmem>>, vector<4x128xbf16>
    tpu.vector_store %arg4[%c0_17, %c0_18], %32 {strides = array<i32>} : memref<16x128xbf16, #tpu.memory_space<vmem>>, vector<4x128xbf16>,
    %c4 = arith.constant 4 : index
    %c0_19 = arith.constant 0 : index
    %34 = vector.load %arg5[%c4, %c0_19] : memref<48x128xbf16, #tpu.memory_space<vmem>>, vector<4x128xbf16>
    %c20 = arith.constant 20 : index
    %c0_20 = arith.constant 0 : index
    %35 = vector.load %arg5[%c20, %c0_20] : memref<48x128xbf16, #tpu.memory_space<vmem>>, vector<4x128xbf16>
    %c36 = arith.constant 36 : index
    %c0_21 = arith.constant 0 : index
    %36 = vector.load %arg5[%c36, %c0_21] : memref<48x128xbf16, #tpu.memory_space<vmem>>, vector<4x128xbf16>
    %cst_22 = arith.constant dense<0.000000e+00> : vector<128x128xf32>
    %37 = tpu.matmul %35, %34, %cst_22 {dimension_numbers = #tpu.dot_dimension_numbers<[0], [0], [1], [1], [0, 1, 1, 1], [], []>} : vector<4x128xbf16>, vector<4x128xbf16>, vector<128x128xf32> -> vector<128x128xf32>
    %38 = vector.broadcast %13 : vector<128x1xf32> to vector<128x128xf32>
    %39 = arith.addf %37, %38 : vector<128x128xf32>
    %cst_23 = arith.constant dense<0xFF800000> : vector<128xf32>
    %40 = vector.multi_reduction <maximumf>, %39, %cst_23 [0] : vector<128x128xf32> to vector<128xf32>
    %41 = vector.shape_cast %40 : vector<128xf32> to vector<1x128xf32>
    %42 = vector.broadcast %41 : vector<1x128xf32> to vector<128x128xf32>
    %43 = arith.subf %39, %42 : vector<128x128xf32>
    %44 = math.exp %43 : vector<128x128xf32>
    %cst_24 = arith.constant dense<0.000000e+00> : vector<128xf32>
    %45 = vector.multi_reduction <add>, %44, %cst_24 [0] : vector<128x128xf32> to vector<128xf32>
    %46 = vector.shape_cast %45 : vector<128xf32> to vector<1x128xf32>
    %47 = arith.truncf %44 : vector<128x128xf32> to vector<128x128xbf16>
    %cst_25 = arith.constant dense<0.000000e+00> : vector<4x128xf32>
    %48 = tpu.matmul %36, %47, %cst_25 {dimension_numbers = #tpu.dot_dimension_numbers<[1], [0], [0], [1], [0, 0, 1, 1], [], []>} : vector<4x128xbf16>, vector<128x128xbf16>, vector<4x128xf32> -> vector<4x128xf32>
    %49 = tpu.reciprocal %46 {approx = true} : vector<1x128xf32> -> vector<1x128xf32>
    %50 = vector.broadcast %49 : vector<1x128xf32> to vector<4x128xf32>
    %51 = arith.mulf %48, %50 : vector<4x128xf32>
    %52 = arith.truncf %51 : vector<4x128xf32> to vector<4x128xbf16>
    %c4_26 = arith.constant 4 : index
    %c0_27 = arith.constant 0 : index
    %53 = vector.load %arg4[%c4_26, %c0_27] : memref<16x128xbf16, #tpu.memory_space<vmem>>, vector<4x128xbf16>
    tpu.vector_store %arg4[%c4_26, %c0_27], %52 {strides = array<i32>} : memref<16x128xbf16, #tpu.memory_space<vmem>>, vector<4x128xbf16>,
    %c8 = arith.constant 8 : index
    %c0_28 = arith.constant 0 : index
    %54 = vector.load %arg5[%c8, %c0_28] : memref<48x128xbf16, #tpu.memory_space<vmem>>, vector<4x128xbf16>
    %c24 = arith.constant 24 : index
    %c0_29 = arith.constant 0 : index
    %55 = vector.load %arg5[%c24, %c0_29] : memref<48x128xbf16, #tpu.memory_space<vmem>>, vector<4x128xbf16>
    %c40 = arith.constant 40 : index
    %c0_30 = arith.constant 0 : index
    %56 = vector.load %arg5[%c40, %c0_30] : memref<48x128xbf16, #tpu.memory_space<vmem>>, vector<4x128xbf16>
    %cst_31 = arith.constant dense<0.000000e+00> : vector<128x128xf32>
    %57 = tpu.matmul %55, %54, %cst_31 {dimension_numbers = #tpu.dot_dimension_numbers<[0], [0], [1], [1], [0, 1, 1, 1], [], []>} : vector<4x128xbf16>, vector<4x128xbf16>, vector<128x128xf32> -> vector<128x128xf32>
    %58 = vector.broadcast %13 : vector<128x1xf32> to vector<128x128xf32>
    %59 = arith.addf %57, %58 : vector<128x128xf32>
    %cst_32 = arith.constant dense<0xFF800000> : vector<128xf32>
    %60 = vector.multi_reduction <maximumf>, %59, %cst_32 [0] : vector<128x128xf32> to vector<128xf32>
    %61 = vector.shape_cast %60 : vector<128xf32> to vector<1x128xf32>
    %62 = vector.broadcast %61 : vector<1x128xf32> to vector<128x128xf32>
    %63 = arith.subf %59, %62 : vector<128x128xf32>
    %64 = math.exp %63 : vector<128x128xf32>
    %cst_33 = arith.constant dense<0.000000e+00> : vector<128xf32>
    %65 = vector.multi_reduction <add>, %64, %cst_33 [0] : vector<128x128xf32> to vector<128xf32>
    %66 = vector.shape_cast %65 : vector<128xf32> to vector<1x128xf32>
    %67 = arith.truncf %64 : vector<128x128xf32> to vector<128x128xbf16>
    %cst_34 = arith.constant dense<0.000000e+00> : vector<4x128xf32>
    %68 = tpu.matmul %56, %67, %cst_34 {dimension_numbers = #tpu.dot_dimension_numbers<[1], [0], [0], [1], [0, 0, 1, 1], [], []>} : vector<4x128xbf16>, vector<128x128xbf16>, vector<4x128xf32> -> vector<4x128xf32>
    %69 = tpu.reciprocal %66 {approx = true} : vector<1x128xf32> -> vector<1x128xf32>
    %70 = vector.broadcast %69 : vector<1x128xf32> to vector<4x128xf32>
    %71 = arith.mulf %68, %70 : vector<4x128xf32>
    %72 = arith.truncf %71 : vector<4x128xf32> to vector<4x128xbf16>
    %c8_35 = arith.constant 8 : index
    %c0_36 = arith.constant 0 : index
    %73 = vector.load %arg4[%c8_35, %c0_36] : memref<16x128xbf16, #tpu.memory_space<vmem>>, vector<4x128xbf16>
    tpu.vector_store %arg4[%c8_35, %c0_36], %72 {strides = array<i32>} : memref<16x128xbf16, #tpu.memory_space<vmem>>, vector<4x128xbf16>,
    %c12 = arith.constant 12 : index
    %c0_37 = arith.constant 0 : index
    %74 = vector.load %arg5[%c12, %c0_37] : memref<48x128xbf16, #tpu.memory_space<vmem>>, vector<4x128xbf16>
    %c28 = arith.constant 28 : index
    %c0_38 = arith.constant 0 : index
    %75 = vector.load %arg5[%c28, %c0_38] : memref<48x128xbf16, #tpu.memory_space<vmem>>, vector<4x128xbf16>
    %c44 = arith.constant 44 : index
    %c0_39 = arith.constant 0 : index
    %76 = vector.load %arg5[%c44, %c0_39] : memref<48x128xbf16, #tpu.memory_space<vmem>>, vector<4x128xbf16>
    %cst_40 = arith.constant dense<0.000000e+00> : vector<128x128xf32>
    %77 = tpu.matmul %75, %74, %cst_40 {dimension_numbers = #tpu.dot_dimension_numbers<[0], [0], [1], [1], [0, 1, 1, 1], [], []>} : vector<4x128xbf16>, vector<4x128xbf16>, vector<128x128xf32> -> vector<128x128xf32>
    %78 = vector.broadcast %13 : vector<128x1xf32> to vector<128x128xf32>
    %79 = arith.addf %77, %78 : vector<128x128xf32>
    %cst_41 = arith.constant dense<0xFF800000> : vector<128xf32>
    %80 = vector.multi_reduction <maximumf>, %79, %cst_41 [0] : vector<128x128xf32> to vector<128xf32>
    %81 = vector.shape_cast %80 : vector<128xf32> to vector<1x128xf32>
    %82 = vector.broadcast %81 : vector<1x128xf32> to vector<128x128xf32>
    %83 = arith.subf %79, %82 : vector<128x128xf32>
    %84 = math.exp %83 : vector<128x128xf32>
    %cst_42 = arith.constant dense<0.000000e+00> : vector<128xf32>
    %85 = vector.multi_reduction <add>, %84, %cst_42 [0] : vector<128x128xf32> to vector<128xf32>
    %86 = vector.shape_cast %85 : vector<128xf32> to vector<1x128xf32>
    %87 = arith.truncf %84 : vector<128x128xf32> to vector<128x128xbf16>
    %cst_43 = arith.constant dense<0.000000e+00> : vector<4x128xf32>
    %88 = tpu.matmul %76, %87, %cst_43 {dimension_numbers = #tpu.dot_dimension_numbers<[1], [0], [0], [1], [0, 0, 1, 1], [], []>} : vector<4x128xbf16>, vector<128x128xbf16>, vector<4x128xf32> -> vector<4x128xf32>
    %89 = tpu.reciprocal %86 {approx = true} : vector<1x128xf32> -> vector<1x128xf32>
    %90 = vector.broadcast %89 : vector<1x128xf32> to vector<4x128xf32>
    %91 = arith.mulf %88, %90 : vector<4x128xf32>
    %92 = arith.truncf %91 : vector<4x128xf32> to vector<4x128xbf16>
    %c12_44 = arith.constant 12 : index
    %c0_45 = arith.constant 0 : index
    %93 = vector.load %arg4[%c12_44, %c0_45] : memref<16x128xbf16, #tpu.memory_space<vmem>>, vector<4x128xbf16>
    tpu.vector_store %arg4[%c12_44, %c0_45], %92 {strides = array<i32>} : memref<16x128xbf16, #tpu.memory_space<vmem>>, vector<4x128xbf16>,
    return
  }
  func.func @transform_0(%arg0: i32) -> (i32, i32) {
    %c0_i32 = arith.constant 0 : i32
    %c0_i32_0 = arith.constant 0 : i32
    return %c0_i32, %arg0 : i32, i32
  }
  func.func @transform_1(%arg0: i32) -> (i32, i32) {
    %c0_i32 = arith.constant 0 : i32
    %c0_i32_0 = arith.constant 0 : i32
    %c0_i32_1 = arith.constant 0 : i32
    return %c0_i32, %c0_i32_0 : i32, i32
  }
  func.func @transform_2(%arg0: i32) -> (i32, i32) {
    %c0_i32 = arith.constant 0 : i32
    %c0_i32_0 = arith.constant 0 : i32
    %c0_i32_1 = arith.constant 0 : i32
    return %c0_i32, %c0_i32_0 : i32, i32
  }
  func.func @transform_3(%arg0: i32) -> (i32, i32) {
    %c0_i32 = arith.constant 0 : i32
    %c0_i32_0 = arith.constant 0 : i32
    return %c0_i32, %arg0 : i32, i32
  }
}

</mosaic_0001>

<llo_original>
// kernel: tpu_custom_call.1
$region0: #{tpu_custom_call.1}
  #allocation0 [shape = 'u32[]', space=smem, size = 0x4, offset = 0x4, fixed_abs, tag = 'smem constant byte address 0x4 - core index']
  #allocation1 [shape = 'u32[72,128]{1,0:T(1,128)}', space=vmem, size = 0x9000, scoped, tag = 'internal scratch']
  #allocation2 [shape = 'bf16[48,128]{1,0:T(8,128)(2,1)}', space=vmem, size = 0x3000, scoped, tag = 'scratch operand']
  %s0 = inlined_call_operand.vmem [shape: bf16[16,256], index: 0, kind: input, shape index: {}]
  %s1 = inlined_call_operand.vmem [shape: bf16[48,16], index: 1, kind: input, shape index: {}]
  %s2 = inlined_call_operand.vmem [shape: f32[48,1], index: 2, kind: input, shape index: {}]
  %s3 = inlined_call_operand.hbm [shape: bf16[16,256], index: 3, kind: output, shape index: {}]
  %s4 = sld [smem:[#allocation0]]
  $region86: #{tpu_custom_call.1} parent=0
    _
  %s6 = ssub.s32 1, %s4
  %s7 = scalar_select 0, %s6, %s4
  $region1: #{tpu_custom_call.1} parent=0
    #allocation3 [shape = 'u8[8192]{0}', space=vmem, size = 0x2000, scoped, tag = 'input window, operand 0']
    #allocation4 [shape = 'u8[8192]{0}', space=vmem, size = 0x2000, scoped, tag = 'output window, operand 0']
    #allocation5 [shape = 's32[2]{0}', space=sflag, size = 0x8, scoped, tag = 'scoped memory for tpu_custom_call.1']
    %8 = vsyncpa [#allocation5], 0
    %s9 = scalar_lea.sflag [#allocation5], 1
    %10 = vsyncpa %s9, 0
    loop: start=0, step=1, limit=4
    $region2: #{tpu_custom_call.1} parent=1 // loop_pre_header
      _
    $region3: #{tpu_custom_call.1} parent=1 // loop_header
      %s12 = sphi 0, %s16
      %p13 = scmp.ge.s32.totalorder %s12, 4
      %s22 = sphi 0, %s24
      %s25 = sphi 0, %s22
      %s26 = sphi 0, %s25
      %s42 = sphi 0, %s26
      %s46 = sphi 0, %s46
      %s48 = sphi 0, %s46
      %s49 = sphi 0, %s48
      %s63 = sphi 0, %s49
      %s67 = sphi 0, %s67
      %s69 = sphi 0, %s67
      %s70 = sphi 0, %s69
      %s84 = sphi 0, %s70
      %s90 = sphi 0, %s92
      %s93 = sphi 0, %s90
      %s94 = sphi 0, %s93
      %s110 = sphi 0, %s94
    $region4: #{tpu_custom_call.1} parent=1 // loop_header_branch
      %15 = sbr.rel (%p13) target = $region8
    $region5: #{tpu_custom_call.1} parent=1 // loop_body
      %s17 = ssub.s32 %s12, 1
      %s18 = ssub.s32 %s12, 2
      %s19 = sadd.s32 %s12, 1
      %s20 = ssub.s32 %s12, %s19
      %p21 = scmp.eq.s32.totalorder %s20, 0
      %s23 = sadd.s32 %s22, 1
      %s24 = scalar_select %p21, %s22, %s23
      %p27 = pneg %p21
      %p28 = scmp.eq.s32.totalorder %s12, 1
      %p29 = por %p27, %p28
      %p30 = scmp.ne.s32.totalorder %s22, %s25
      %p31 = scmp.eq.s32.totalorder %s12, 0
      %p32 = por %p30, %p31
      %p33 = scmp.ne.s32.totalorder %s22, %s25
      %p34 = scmp.eq.s32.totalorder %s17, 1
      %p35 = por %p33, %p34
      %p36 = scmp.ne.s32.totalorder %s25, %s26
      %p37 = scmp.eq.s32.totalorder %s17, 0
      %p38 = por %p36, %p37
      %p39 = scmp.ne.s32.totalorder %s25, %s26
      %p40 = scmp.eq.s32.totalorder %s18, 1
      %p41 = por %p39, %p40
      %p43 = scmp.ne.s32.totalorder %s26, %s42
      %p44 = scmp.eq.s32.totalorder %s18, 0
      %p45 = por %p43, %p44
      %s47 = sadd.s32 %s46, 1
      %p50 = scmp.eq.s32.totalorder %s12, 1
      %p51 = scmp.ne.s32.totalorder %s46, %s48
      %p52 = scmp.eq.s32.totalorder %s12, 0
      %p53 = por %p51, %p52
      %p54 = scmp.ne.s32.totalorder %s46, %s48
      %p55 = scmp.eq.s32.totalorder %s17, 1
      %p56 = por %p54, %p55
      %p57 = scmp.ne.s32.totalorder %s48, %s49
      %p58 = scmp.eq.s32.totalorder %s17, 0
      %p59 = por %p57, %p58
      %p60 = scmp.ne.s32.totalorder %s48, %s49
      %p61 = scmp.eq.s32.totalorder %s18, 1
      %p62 = por %p60, %p61
      %p64 = scmp.ne.s32.totalorder %s49, %s63
      %p65 = scmp.eq.s32.totalorder %s18, 0
      %p66 = por %p64, %p65
      %s68 = sadd.s32 %s67, 1
      %p71 = scmp.eq.s32.totalorder %s12, 1
      %p72 = scmp.ne.s32.totalorder %s67, %s69
      %p73 = scmp.eq.s32.totalorder %s12, 0
      %p74 = por %p72, %p73
      %p75 = scmp.ne.s32.totalorder %s67, %s69
      %p76 = scmp.eq.s32.totalorder %s17, 1
      %p77 = por %p75, %p76
      %p78 = scmp.ne.s32.totalorder %s69, %s70
      %p79 = scmp.eq.s32.totalorder %s17, 0
      %p80 = por %p78, %p79
      %p81 = scmp.ne.s32.totalorder %s69, %s70
      %p82 = scmp.eq.s32.totalorder %s18, 1
      %p83 = por %p81, %p82
      %p85 = scmp.ne.s32.totalorder %s70, %s84
      %p86 = scmp.eq.s32.totalorder %s18, 0
      %p87 = por %p85, %p86
      %s88 = ssub.s32 %s12, %s19
      %p89 = scmp.eq.s32.totalorder %s88, 0
      %s91 = sadd.s32 %s90, 1
      %s92 = scalar_select %p89, %s90, %s91
      %p95 = pneg %p89
      %p96 = scmp.eq.s32.totalorder %s12, 1
      %p97 = por %p95, %p96
      %p98 = scmp.ne.s32.totalorder %s90, %s93
      %p99 = scmp.eq.s32.totalorder %s12, 0
      %p100 = por %p98, %p99
      %p101 = scmp.ne.s32.totalorder %s90, %s93
      %p102 = scmp.eq.s32.totalorder %s17, 1
      %p103 = por %p101, %p102
      %p104 = scmp.ne.s32.totalorder %s93, %s94
      %p105 = scmp.eq.s32.totalorder %s17, 0
      %p106 = por %p104, %p105
      %p107 = scmp.ne.s32.totalorder %s93, %s94
      %p108 = scmp.eq.s32.totalorder %s18, 1
      %p109 = por %p107, %p108
      %p111 = scmp.ne.s32.totalorder %s94, %s110
      %p112 = scmp.eq.s32.totalorder %s18, 0
      %p113 = por %p111, %p112
      %p114 = scmp.le.s32.totalorder 1, %s12
      %p115 = scmp.lt.s32.totalorder %s12, 3
      %p116 = pnand %p114, %p115
      %p117 = pneg %p116
      // Predicated region
      $region9: #{tpu_custom_call.1} parent=5 // pred_check
        _
      $region10: #{tpu_custom_call.1} parent=5 // pred_check_branch
        %119 = sbr.rel (%p116) target = $region12
      $region11: #{tpu_custom_call.1} parent=5 // pred_region
        %s120 = ssub.s32 %s12, 1
        // Predicated region
        $region13: #{tpu_custom_call.1} parent=11 // pred_check
          %p121 = pneg %p59
        $region14: #{tpu_custom_call.1} parent=11 // pred_check_branch
          %123 = sbr.rel (%p121) target = $region16
        $region15: #{tpu_custom_call.1} parent=11 // pred_region
          _
        $region16: #{tpu_custom_call.1} parent=11 // pred_fallthru
          _
        // Predicated region
        $region17: #{tpu_custom_call.1} parent=11 // pred_check
          %p124 = pneg %p80
        $region18: #{tpu_custom_call.1} parent=11 // pred_check_branch
          %126 = sbr.rel (%p124) target = $region20
        $region19: #{tpu_custom_call.1} parent=11 // pred_region
          _
        $region20: #{tpu_custom_call.1} parent=11 // pred_fallthru
          _
      $region12: #{tpu_custom_call.1} parent=5 // pred_fallthru
        _
      %p127 = scmp.lt.s32.totalorder %s12, 2
      // Predicated region
      $region21: #{tpu_custom_call.1} parent=5 // pred_check
        %p128 = pneg %p127
      $region22: #{tpu_custom_call.1} parent=5 // pred_check_branch
        %130 = sbr.rel (%p128) target = $region24
      $region23: #{tpu_custom_call.1} parent=5 // pred_region
        // Predicated region
        $region25: #{tpu_custom_call.1} parent=23 // pred_check
          %p131 = pneg %p32
        $region26: #{tpu_custom_call.1} parent=23 // pred_check_branch
          %133 = sbr.rel (%p131) target = $region28
        $region27: #{tpu_custom_call.1} parent=23 // pred_region
          %s134 = sand.u32 %s22, 1
          %s135 = sand.u32 %s22, 1
          %s136 = smul.addr %s135, 8
          %s137 = scalar_lea.vmem [#allocation3], %s136
          %s138 = smul.addr %s12, 4
          %s139 = scalar_lea.vmem %s0, %s138
          // Predicated region
          $region29: #{tpu_custom_call.1} parent=27 // pred_check
            _
          $region30: #{tpu_custom_call.1} parent=27 // pred_check_branch
            %141 = sbr.rel (0) target = $region32
          $region31: #{tpu_custom_call.1} parent=27 // pred_region
            // Predicated region
            $region33: #{tpu_custom_call.1} parent=31 // pred_check
              _
            $region34: #{tpu_custom_call.1} parent=31 // pred_check_branch
              %143 = sbr.rel target = $region36
            $region35: #{tpu_custom_call.1} parent=31 // pred_region
              // Predicated region
              $region48: #{tpu_custom_call.1} parent=35 // pred_check
                _
              $region49: #{tpu_custom_call.1} parent=35 // pred_check_branch
                %161 = sbr.rel (0) target = $region51
              $region50: #{tpu_custom_call.1} parent=35 // pred_region
                loop: start=0, step=1, limit=1
                $region52: #{tpu_custom_call.1} parent=50 // loop_pre_header
                  _
                $region53: #{tpu_custom_call.1} parent=50 // loop_header
                  %s163 = sphi 0, %s167
                  %p164 = scmp.ge.s32.totalorder %s163, 1
                  %s168 = sphi %s139, %s139
                  %s169 = sphi %s137, %s137
                $region54: #{tpu_custom_call.1} parent=50 // loop_header_branch
                  %166 = sbr.rel (%p164) target = $region58
                $region55: #{tpu_custom_call.1} parent=50 // loop_body
                  _
                $region56: #{tpu_custom_call.1} parent=50 // loop_footer
                  %s167 = sadd.s32 1, %s163
                $region57: #{tpu_custom_call.1} parent=50 // loop_footer_branch
                  %162 = sbr.rel target = $region53
                $region58: #{tpu_custom_call.1} parent=50 // loop_exit
                  _
                %s171 = ssub.s32 16, 1
                loop: start=0, step=1, limit=1
                $region59: #{tpu_custom_call.1} parent=50 // loop_pre_header
                  _
                $region60: #{tpu_custom_call.1} parent=50 // loop_header
                  %s173 = sphi 0, %s177
                  %p174 = scmp.ge.s32.totalorder %s173, 1
                  %s178 = sphi %s139, %s139
                  %s179 = sphi %s137, %s137
                $region61: #{tpu_custom_call.1} parent=50 // loop_header_branch
                  %176 = sbr.rel (%p174) target = $region65
                $region62: #{tpu_custom_call.1} parent=50 // loop_body
                  %v180 = vld [vmem:[%s178] sm:%s171]
                  %181 = vst [vmem:[%s179] sm:%s171] %v180
                  %v182 = vld [vmem:[%s178 + $0x8] sm:%s171]
                  %183 = vst [vmem:[%s179 + $0x4] sm:%s171] %v182
                $region63: #{tpu_custom_call.1} parent=50 // loop_footer
                  %s177 = sadd.s32 1, %s173
                $region64: #{tpu_custom_call.1} parent=50 // loop_footer_branch
                  %172 = sbr.rel target = $region60
                $region65: #{tpu_custom_call.1} parent=50 // loop_exit
                  _
              $region51: #{tpu_custom_call.1} parent=35 // pred_fallthru
                _
            $region36: #{tpu_custom_call.1} parent=31 // pred_fallthru
              _
            // Predicated region
            $region37: #{tpu_custom_call.1} parent=31 // pred_check
              _
            $region38: #{tpu_custom_call.1} parent=31 // pred_check_branch
              %145 = sbr.rel (0) target = $region40
            $region39: #{tpu_custom_call.1} parent=31 // pred_region
              %s147 = ssub.s32 16, 1
              loop: start=0, step=1, limit=1
              $region41: #{tpu_custom_call.1} parent=39 // loop_pre_header
                _
              $region42: #{tpu_custom_call.1} parent=39 // loop_header
                %s149 = sphi 0, %s153
                %p150 = scmp.ge.s32.totalorder %s149, 1
                %s154 = sphi %s139, %s139
                %s155 = sphi %s137, %s137
              $region43: #{tpu_custom_call.1} parent=39 // loop_header_branch
                %152 = sbr.rel (%p150) target = $region47
              $region44: #{tpu_custom_call.1} parent=39 // loop_body
                %v156 = vld [vmem:[%s154] sm:%s147]
                %157 = vst [vmem:[%s155] sm:%s147] %v156
                %v158 = vld [vmem:[%s154 + $0x8] sm:%s147]
                %159 = vst [vmem:[%s155 + $0x4] sm:%s147] %v158
              $region45: #{tpu_custom_call.1} parent=39 // loop_footer
                %s153 = sadd.s32 1, %s149
              $region46: #{tpu_custom_call.1} parent=39 // loop_footer_branch
                %148 = sbr.rel target = $region42
              $region47: #{tpu_custom_call.1} parent=39 // loop_exit
                _
            $region40: #{tpu_custom_call.1} parent=31 // pred_fallthru
              _
          $region32: #{tpu_custom_call.1} parent=27 // pred_fallthru
            _
          %184 = vnop
        $region28: #{tpu_custom_call.1} parent=23 // pred_fallthru
          _
      $region24: #{tpu_custom_call.1} parent=5 // pred_fallthru
        _
      %p185 = scmp.le.s32.totalorder 1, %s12
      %p186 = scmp.lt.s32.totalorder %s12, 3
      %p187 = pnand %p185, %p186
      %p188 = pneg %p187
      // Predicated region
      $region66: #{tpu_custom_call.1} parent=5 // pred_check
        _
      $region67: #{tpu_custom_call.1} parent=5 // pred_check_branch
        %190 = sbr.rel (%p187) target = $region69
      $region68: #{tpu_custom_call.1} parent=5 // pred_region
        %s191 = ssub.s32 %s12, 1
        %s192 = sand.u32 %s25, 1
        %s193 = sand.u32 %s25, 1
        %s194 = smul.addr %s193, 8
        %s195 = scalar_lea.vmem [#allocation3], %s194
        // Predicated region
        $region70: #{tpu_custom_call.1} parent=68 // pred_check
          %p196 = pneg %p38
        $region71: #{tpu_custom_call.1} parent=68 // pred_check_branch
          %198 = sbr.rel (%p196) target = $region73
        $region72: #{tpu_custom_call.1} parent=68 // pred_region
          _
        $region73: #{tpu_custom_call.1} parent=68 // pred_fallthru
          _
        %s199 = sand.u32 %s25, 1
        %s200 = sand.u32 %s25, 1
        %s201 = smul.addr %s200, 8
        %s202 = scalar_lea.vmem [#allocation3], %s201
        %p203 = pneg %p38
        %p204 = pneg %p35
        %p205 = pneg %p59
        %p206 = pneg %p56
        %p207 = pneg %p80
        %p208 = pneg %p77
        %p209 = pneg %p106
        %p210 = pneg %p103
        %s211 = sand.u32 %s93, 1
        %s212 = scalar_lea.sflag [#allocation5], %s211
        %s213 = sand.u32 %s93, 1
        %s214 = smul.addr %s213, 8
        %s215 = scalar_lea.vmem [#allocation4], %s214
        %v217 = vld [vmem:[%s1] sm:$0xf]
        %v218 = vld [vmem:[%s1 + $0x4] sm:$0xf]
        %v219 = vld [vmem:[%s1 + $0x8] sm:$0xf]
        %v220 = vld [vmem:[%s1 + $0xc] sm:$0xf]
        %v221 = vld [vmem:[%s1 + $0x10] sm:$0xf]
        %v222 = vld [vmem:[%s1 + $0x14] sm:$0xf]
        %v223 = vld [vmem:[%s195] sm:$0xf]
        %v224 = vld [vmem:[%s195 + $0x4] sm:$0xf]
        %v225 = vld [vmem:[%s2] sm:$0xff]
        %v226 = vld [vmem:[%s2 + $0x8] sm:$0xff]
        %v227 = vld [vmem:[%s2 + $0x10] sm:$0xff]
        %v228 = vld [vmem:[%s2 + $0x18] sm:$0xff]
        %v229 = vld [vmem:[%s2 + $0x20] sm:$0xff]
        %v230 = vld [vmem:[%s2 + $0x28] sm:$0xff]
        %232 = vset.pattern.permute.xlu0 0
        %233 = vperm.xlu0 %232, %v225
        %v234 = vpop.permute.xlu0 %233
        %237 = vset.pattern.permute.xlu0 0
        %238 = vperm.xlu0 %237, %v226
        %v239 = vpop.permute.xlu0 %238
        %242 = vset.pattern.permute.xlu0 0
        %243 = vperm.xlu0 %242, %v227
        %v244 = vpop.permute.xlu0 %243
        %247 = vset.pattern.permute.xlu0 0
        %248 = vperm.xlu0 %247, %v228
        %v249 = vpop.permute.xlu0 %248
        %252 = vset.pattern.permute.xlu0 0
        %253 = vperm.xlu0 %252, %v229
        %v254 = vpop.permute.xlu0 %253
        %257 = vset.pattern.permute.xlu0 0
        %258 = vperm.xlu0 %257, %v230
        %v259 = vpop.permute.xlu0 %258
        %v267 = vunpack.c.l.b16 %v217
        %v268 = vunpack.c.l.b16 %v218
        %v269 = vunpack.c.l.b16 %v219
        %v270 = vunpack.c.l.b16 %v220
        %v271 = vunpack.c.l.b16 %v221
        %v272 = vunpack.c.l.b16 %v222
        %v273 = vpack.c.b16 %v268, %v267
        %v274 = vpack.c.b16 %v270, %v269
        %v275 = vpack.c.b16 %v272, %v271
        %v278 = vunpack.c.l.b16 %v223
        %v279 = vunpack.c.l.b16 %v224
        %v280 = vpack.c.b16 %v279, %v278
        %vm282 = vcmask 130048
        %v284 = vsel %vm282, %v273, 0
        %v287 = vsel %vm282, %v274, 0
        %v290 = vsel %vm282, %v275, 0
        %292 = vmatpush.bf16.msra.mxu0 0
        %293 = vmatpush.bf16.msra.mxu0 0
        %294 = vmatpush.bf16.msra.mxu0 0
        %295 = vmatpush.bf16.msra.mxu0 0
        %296 = vmatpush.bf16.msra.mxu0 0
        %297 = vmatpush.bf16.msra.mxu0 0
        %298 = vmatpush.bf16.msra.mxu0 0
        %299 = vmatpush.bf16.msra.mxu0 %v280
        %300 = vmatmul.bf16.gmra.mxu0 %v284
        %v301 = vpop.f32.mrf.mxu0
        %v302 = vadd.f32 %v234, %v301
        %v303 = vpop.f32.mrf.mxu0
        %v304 = vadd.f32 %v239, %v303
        %305 = vmatmul.bf16.gmra.mxu0 %v287
        %v306 = vpop.f32.mrf.mxu0
        %v307 = vadd.f32 %v244, %v306
        %v308 = vpop.f32.mrf.mxu0
        %v309 = vadd.f32 %v249, %v308
        %310 = vmatmul.bf16.gmra.mxu0 %v290
        %v311 = vpop.f32.mrf.mxu0
        %v312 = vadd.f32 %v254, %v311
        %v313 = vpop.f32.mrf.mxu0
        %v314 = vadd.f32 %v259, %v313
        %315 = vdwg.mxu0
        %v316 = vpack.c.bf16 %v302, %v302
        %v317 = vpack.c.bf16 %v304, %v304
        %v318 = vpack.c.bf16 %v307, %v307
        %v319 = vpack.c.bf16 %v309, %v309
        %v320 = vpack.c.bf16 %v312, %v312
        %v321 = vpack.c.bf16 %v314, %v314
        %322 = vst [vmem:[#allocation2] sm:$0xf] %v316
        %323 = vst [vmem:[#allocation2 + $0x4] sm:$0xf] %v317
        %324 = vst [vmem:[#allocation2 + $0x8] sm:$0xf] %v318
        %325 = vst [vmem:[#allocation2 + $0xc] sm:$0xf] %v319
        %326 = vst [vmem:[#allocation2 + $0x10] sm:$0xf] %v320
        %327 = vst [vmem:[#allocation2 + $0x14] sm:$0xf] %v321
        %v328 = vlaneseq
        %v329 = vshrl.u32 %v328, 7
        %v330 = vadd.s32 %v329, 8
        %v331 = vadd.s32 %v329, 16
        %v332 = vadd.s32 %v329, 24
        %v333 = vadd.s32 %v329, 32
        %v334 = vadd.s32 %v329, 40
        %v335 = vadd.s32 %v329, 48
        %v336 = vadd.s32 %v329, 56
        %v337 = vadd.s32 %v329, 64
        %v338 = vadd.s32 %v329, 72
        %v339 = vadd.s32 %v329, 80
        %v340 = vadd.s32 %v329, 88
        %v341 = vadd.s32 %v329, 96
        %v342 = vadd.s32 %v329, 104
        %v343 = vadd.s32 %v329, 112
        %v344 = vadd.s32 %v329, 120
        %vm345 = vcmp.ge.s32.totalorder %v329, 64
        %vm346 = vcmp.ge.s32.totalorder %v330, 64
        %vm347 = vcmp.ge.s32.totalorder %v331, 64
        %vm348 = vcmp.ge.s32.totalorder %v332, 64
        %vm349 = vcmp.ge.s32.totalorder %v333, 64
        %vm350 = vcmp.ge.s32.totalorder %v334, 64
        %vm351 = vcmp.ge.s32.totalorder %v335, 64
        %vm352 = vcmp.ge.s32.totalorder %v336, 64
        %vm353 = vcmp.ge.s32.totalorder %v337, 64
        %vm354 = vcmp.ge.s32.totalorder %v338, 64
        %vm355 = vcmp.ge.s32.totalorder %v339, 64
        %vm356 = vcmp.ge.s32.totalorder %v340, 64
        %vm357 = vcmp.ge.s32.totalorder %v341, 64
        %vm358 = vcmp.ge.s32.totalorder %v342, 64
        %vm359 = vcmp.ge.s32.totalorder %v343, 64
        %vm360 = vcmp.ge.s32.totalorder %v344, 64
        %v361 = vsel %vm345, -1e+30, 0.0
        %v362 = vsel %vm346, -1e+30, 0.0
        %v363 = vsel %vm347, -1e+30, 0.0
        %v364 = vsel %vm348, -1e+30, 0.0
        %v365 = vsel %vm349, -1e+30, 0.0
        %v366 = vsel %vm350, -1e+30, 0.0
        %v367 = vsel %vm351, -1e+30, 0.0
        %v368 = vsel %vm352, -1e+30, 0.0
        %v369 = vsel %vm353, -1e+30, 0.0
        %v370 = vsel %vm354, -1e+30, 0.0
        %v371 = vsel %vm355, -1e+30, 0.0
        %v372 = vsel %vm356, -1e+30, 0.0
        %v373 = vsel %vm357, -1e+30, 0.0
        %v374 = vsel %vm358, -1e+30, 0.0
        %v375 = vsel %vm359, -1e+30, 0.0
        %v376 = vsel %vm360, -1e+30, 0.0
        %v377 = vld [vmem:[#allocation2] sm:$0x3]
        %v378 = vld [vmem:[#allocation2 + $0x8] sm:$0x3]
        %v379 = vld [vmem:[#allocation2 + $0x10] sm:$0x3]
        %380 = vxpose.xlu0.c.b16.start [1/8] %v378, 128
        %381 = vxpose.xlu0.c.b16.cont [2/8] 0, 128
        %382 = vxpose.xlu0.c.b16.cont [3/8] 0, 128
        %383 = vxpose.xlu0.c.b16.cont [4/8] 0, 128
        %384 = vxpose.xlu0.c.b16.cont [5/8] 0, 128
        %385 = vxpose.xlu0.c.b16.cont [6/8] 0, 128
        %386 = vxpose.xlu0.c.b16.cont [7/8] 0, 128
        %387 = vxpose.xlu0.c.b16.end [8/8] 0, 128
        %v388 = vpop.trf.xlu0
        %v389 = vpop.trf.xlu0
        %v390 = vpop.trf.xlu0
        %v391 = vpop.trf.xlu0
        %v392 = vpop.trf.xlu0
        %v393 = vpop.trf.xlu0
        %v394 = vpop.trf.xlu0
        %v395 = vpop.trf.xlu0
        %vm396 = vcmask 31744
        %v398 = vsel %vm396, %v388, 0
        %v401 = vsel %vm396, %v389, 0
        %v404 = vsel %vm396, %v390, 0
        %v407 = vsel %vm396, %v391, 0
        %v410 = vsel %vm396, %v392, 0
        %v413 = vsel %vm396, %v393, 0
        %v416 = vsel %vm396, %v394, 0
        %v419 = vsel %vm396, %v395, 0
        %vm421 = vcmask 1041408
        %v423 = vsel %vm421, %v377, 0
        %425 = vmatpush.bf16.msra.mxu0 0
        %426 = vmatpush.bf16.msra.mxu0 0
        %427 = vmatpush.bf16.msra.mxu0 0
        %428 = vmatpush.bf16.msra.mxu0 0
        %429 = vmatpush.bf16.msra.mxu0 0
        %430 = vmatpush.bf16.msra.mxu0 0
        %431 = vmatpush.bf16.msra.mxu0 0
        %432 = vmatpush.bf16.msra.mxu0 %v423
        %433 = vmatmul.bf16.gmra.mxu0 %v398
        %v434 = vpop.f32.mrf.mxu0
        %v435 = vadd.f32 %v361, %v434
        %v436 = vpop.f32.mrf.mxu0
        %v437 = vadd.f32 %v362, %v436
        %438 = vmatmul.bf16.gmra.mxu0 %v401
        %v439 = vpop.f32.mrf.mxu0
        %v440 = vadd.f32 %v363, %v439
        %v441 = vpop.f32.mrf.mxu0
        %v442 = vadd.f32 %v364, %v441
        %443 = vmatmul.bf16.gmra.mxu0 %v404
        %v444 = vpop.f32.mrf.mxu0
        %v445 = vadd.f32 %v365, %v444
        %v446 = vpop.f32.mrf.mxu0
        %v447 = vadd.f32 %v366, %v446
        %448 = vmatmul.bf16.gmra.mxu0 %v407
        %v449 = vpop.f32.mrf.mxu0
        %v450 = vadd.f32 %v367, %v449
        %v451 = vpop.f32.mrf.mxu0
        %v452 = vadd.f32 %v368, %v451
        %453 = vmatmul.bf16.gmra.mxu0 %v410
        %v454 = vpop.f32.mrf.mxu0
        %v455 = vadd.f32 %v369, %v454
        %v456 = vpop.f32.mrf.mxu0
        %v457 = vadd.f32 %v370, %v456
        %458 = vmatmul.bf16.gmra.mxu0 %v413
        %v459 = vpop.f32.mrf.mxu0
        %v460 = vadd.f32 %v371, %v459
        %v461 = vpop.f32.mrf.mxu0
        %v462 = vadd.f32 %v372, %v461
        %463 = vmatmul.bf16.gmra.mxu0 %v416
        %v464 = vpop.f32.mrf.mxu0
        %v465 = vadd.f32 %v373, %v464
        %v466 = vpop.f32.mrf.mxu0
        %v467 = vadd.f32 %v374, %v466
        %468 = vmatmul.bf16.gmra.mxu0 %v419
        %v469 = vpop.f32.mrf.mxu0
        %v470 = vadd.f32 %v375, %v469
        %v471 = vpop.f32.mrf.mxu0
        %v472 = vadd.f32 %v376, %v471
        %473 = vdwg.mxu0
        %v474 = vmax.f32 %v435, %v445
        %v475 = vmax.f32 %v437, %v447
        %v476 = vmax.f32 %v440, %v450
        %v477 = vmax.f32 %v442, %v452
        %v478 = vmax.f32 %v474, %v455
        %v479 = vmax.f32 %v475, %v457
        %v480 = vmax.f32 %v476, %v460
        %v481 = vmax.f32 %v477, %v462
        %v482 = vmax.f32 %v478, %v465
        %v483 = vmax.f32 %v479, %v467
        %v484 = vmax.f32 %v480, %v470
        %v485 = vmax.f32 %v481, %v472
        %v486 = vmax.f32 %v482, %v483
        %v487 = vmax.f32 %v484, %v485
        %v488 = vmax.f32 %v486, %v487
        %v489 = vrot.slane %v488, 4
        %v490 = vmax.f32 %v488, %v489
        %v491 = vrot.slane %v490, 2
        %v492 = vmax.f32 %v490, %v491
        %v493 = vrot.slane %v492, 1
        %v494 = vmax.f32 %v492, %v493
        %v495 = vsub.f32 %v435, %v494
        %v496 = vsub.f32 %v437, %v494
        %v497 = vsub.f32 %v440, %v494
        %v498 = vsub.f32 %v442, %v494
        %v499 = vsub.f32 %v445, %v494
        %v500 = vsub.f32 %v447, %v494
        %v501 = vsub.f32 %v450, %v494
        %v502 = vsub.f32 %v452, %v494
        %v503 = vsub.f32 %v455, %v494
        %v504 = vsub.f32 %v457, %v494
        %v505 = vsub.f32 %v460, %v494
        %v506 = vsub.f32 %v462, %v494
        %v507 = vsub.f32 %v465, %v494
        %v508 = vsub.f32 %v467, %v494
        %v509 = vsub.f32 %v470, %v494
        %v510 = vsub.f32 %v472, %v494
        %v511 = vmul.f32 %v495, 1.442695
        %v512 = vpow.pop %v511
        %v513 = vmul.f32 %v496, 1.442695
        %v514 = vpow.pop %v513
        %v515 = vmul.f32 %v497, 1.442695
        %v516 = vpow.pop %v515
        %v517 = vmul.f32 %v498, 1.442695
        %v518 = vpow.pop %v517
        %v519 = vmul.f32 %v499, 1.442695
        %v520 = vpow.pop %v519
        %v521 = vmul.f32 %v500, 1.442695
        %v522 = vpow.pop %v521
        %v523 = vmul.f32 %v501, 1.442695
        %v524 = vpow.pop %v523
        %v525 = vmul.f32 %v502, 1.442695
        %v526 = vpow.pop %v525
        %v527 = vmul.f32 %v503, 1.442695
        %v528 = vpow.pop %v527
        %v529 = vmul.f32 %v504, 1.442695
        %v530 = vpow.pop %v529
        %v531 = vmul.f32 %v505, 1.442695
        %v532 = vpow.pop %v531
        %v533 = vmul.f32 %v506, 1.442695
        %v534 = vpow.pop %v533
        %v535 = vmul.f32 %v507, 1.442695
        %v536 = vpow.pop %v535
        %v537 = vmul.f32 %v508, 1.442695
        %v538 = vpow.pop %v537
        %v539 = vmul.f32 %v509, 1.442695
        %v540 = vpow.pop %v539
        %v541 = vmul.f32 %v510, 1.442695
        %v542 = vpow.pop %v541
        %v543 = vadd.f32 %v512, %v514
        %v544 = vadd.f32 %v543, %v516
        %v545 = vadd.f32 %v544, %v518
        %v546 = vadd.f32 %v545, %v520
        %v547 = vadd.f32 %v546, %v522
        %v548 = vadd.f32 %v547, %v524
        %v549 = vadd.f32 %v548, %v526
        %v550 = vadd.f32 %v549, %v528
        %v551 = vadd.f32 %v550, %v530
        %v552 = vadd.f32 %v551, %v532
        %v553 = vadd.f32 %v552, %v534
        %v554 = vadd.f32 %v553, %v536
        %v555 = vadd.f32 %v554, %v538
        %v556 = vadd.f32 %v555, %v540
        %v557 = vadd.f32 %v556, %v542
        %v558 = vrot.slane %v557, 4
        %v559 = vadd.f32 %v557, %v558
        %v560 = vrot.slane %v559, 2
        %v561 = vadd.f32 %v559, %v560
        %v562 = vrot.slane %v561, 1
        %v563 = vadd.f32 %v561, %v562
        %v564 = vpack.c.bf16 %v514, %v512
        %v565 = vpack.c.bf16 %v518, %v516
        %v566 = vpack.c.bf16 %v522, %v520
        %v567 = vpack.c.bf16 %v526, %v524
        %v568 = vpack.c.bf16 %v530, %v528
        %v569 = vpack.c.bf16 %v534, %v532
        %v570 = vpack.c.bf16 %v538, %v536
        %v571 = vpack.c.bf16 %v542, %v540
        %572 = vmatpush.bf16.msra.mxu0 %v571
        %573 = vmatpush.bf16.msra.mxu0 %v570
        %574 = vmatpush.bf16.msra.mxu0 %v569
        %575 = vmatpush.bf16.msra.mxu0 %v568
        %576 = vmatpush.bf16.msra.mxu0 %v567
        %577 = vmatpush.bf16.msra.mxu0 %v566
        %578 = vmatpush.bf16.msra.mxu0 %v565
        %579 = vmatpush.bf16.msra.mxu0 %v564
        %580 = vmatmul.bf16.gmra.mxu0 %v379
        %v581 = vpop.f32.mrf.mxu0
        %v582 = vadd.f32 0.0, %v581
        %v583 = vpop.f32.mrf.mxu0
        %584 = vdwg.mxu0
        %v585 = vrcp.pop %v563
        %v586 = vmul.f32 %v582, %v585
        %v587 = vpack.c.bf16 %v586, %v586
        %588 = vst [vmem:[%s215] sm:$0x3] %v587
        %v589 = vld [vmem:[#allocation2] sm:$0xc]
        %v590 = vld [vmem:[#allocation2 + $0x8] sm:$0xc]
        %v591 = vld [vmem:[#allocation2 + $0x10] sm:$0xc]
        %v593 = vunpack.c.l.b16 %v590
        %v594 = vpack.c.b16 %v593, %v593
        %v595 = vrot.slane %v594, 2
        %597 = vxpose.xlu0.c.b16.start [1/8] %v595, 128
        %598 = vxpose.xlu0.c.b16.cont [2/8] 0, 128
        %599 = vxpose.xlu0.c.b16.cont [3/8] 0, 128
        %600 = vxpose.xlu0.c.b16.cont [4/8] 0, 128
        %601 = vxpose.xlu0.c.b16.cont [5/8] 0, 128
        %602 = vxpose.xlu0.c.b16.cont [6/8] 0, 128
        %603 = vxpose.xlu0.c.b16.cont [7/8] 0, 128
        %604 = vxpose.xlu0.c.b16.end [8/8] 0, 128
        %v605 = vpop.trf.xlu0
        %v606 = vpop.trf.xlu0
        %v607 = vpop.trf.xlu0
        %v608 = vpop.trf.xlu0
        %v609 = vpop.trf.xlu0
        %v610 = vpop.trf.xlu0
        %v611 = vpop.trf.xlu0
        %v612 = vpop.trf.xlu0
        %v614 = vunpack.c.l.b16 %v589
        %v615 = vpack.c.b16 %v614, %v614
        %v616 = vrot.slane %v615, 2
        %v618 = vsel %vm396, %v605, 0
        %v621 = vsel %vm396, %v606, 0
        %v624 = vsel %vm396, %v607, 0
        %v627 = vsel %vm396, %v608, 0
        %v630 = vsel %vm396, %v609, 0
        %v633 = vsel %vm396, %v610, 0
        %v636 = vsel %vm396, %v611, 0
        %v639 = vsel %vm396, %v612, 0
        %v642 = vsel %vm421, %v616, 0
        %644 = vmatpush.bf16.msra.mxu0 0
        %645 = vmatpush.bf16.msra.mxu0 0
        %646 = vmatpush.bf16.msra.mxu0 0
        %647 = vmatpush.bf16.msra.mxu0 0
        %648 = vmatpush.bf16.msra.mxu0 0
        %649 = vmatpush.bf16.msra.mxu0 0
        %650 = vmatpush.bf16.msra.mxu0 0
        %651 = vmatpush.bf16.msra.mxu0 %v642
        %652 = vmatmul.bf16.gmra.mxu0 %v618
        %v653 = vpop.f32.mrf.mxu0
        %v654 = vadd.f32 %v361, %v653
        %v655 = vpop.f32.mrf.mxu0
        %v656 = vadd.f32 %v362, %v655
        %657 = vmatmul.bf16.gmra.mxu0 %v621
        %v658 = vpop.f32.mrf.mxu0
        %v659 = vadd.f32 %v363, %v658
        %v660 = vpop.f32.mrf.mxu0
        %v661 = vadd.f32 %v364, %v660
        %662 = vmatmul.bf16.gmra.mxu0 %v624
        %v663 = vpop.f32.mrf.mxu0
        %v664 = vadd.f32 %v365, %v663
        %v665 = vpop.f32.mrf.mxu0
        %v666 = vadd.f32 %v366, %v665
        %667 = vmatmul.bf16.gmra.mxu0 %v627
        %v668 = vpop.f32.mrf.mxu0
        %v669 = vadd.f32 %v367, %v668
        %v670 = vpop.f32.mrf.mxu0
        %v671 = vadd.f32 %v368, %v670
        %672 = vmatmul.bf16.gmra.mxu0 %v630
        %v673 = vpop.f32.mrf.mxu0
        %v674 = vadd.f32 %v369, %v673
        %v675 = vpop.f32.mrf.mxu0
        %v676 = vadd.f32 %v370, %v675
        %677 = vmatmul.bf16.gmra.mxu0 %v633
        %v678 = vpop.f32.mrf.mxu0
        %v679 = vadd.f32 %v371, %v678
        %v680 = vpop.f32.mrf.mxu0
        %v681 = vadd.f32 %v372, %v680
        %682 = vmatmul.bf16.gmra.mxu0 %v636
        %v683 = vpop.f32.mrf.mxu0
        %v684 = vadd.f32 %v373, %v683
        %v685 = vpop.f32.mrf.mxu0
        %v686 = vadd.f32 %v374, %v685
        %687 = vmatmul.bf16.gmra.mxu0 %v639
        %v688 = vpop.f32.mrf.mxu0
        %v689 = vadd.f32 %v375, %v688
        %v690 = vpop.f32.mrf.mxu0
        %v691 = vadd.f32 %v376, %v690
        %692 = vdwg.mxu0
        %v693 = vmax.f32 %v654, %v664
        %v694 = vmax.f32 %v656, %v666
        %v695 = vmax.f32 %v659, %v669
        %v696 = vmax.f32 %v661, %v671
        %v697 = vmax.f32 %v693, %v674
        %v698 = vmax.f32 %v694, %v676
        %v699 = vmax.f32 %v695, %v679
        %v700 = vmax.f32 %v696, %v681
        %v701 = vmax.f32 %v697, %v684
        %v702 = vmax.f32 %v698, %v686
        %v703 = vmax.f32 %v699, %v689
        %v704 = vmax.f32 %v700, %v691
        %v705 = vmax.f32 %v701, %v702
        %v706 = vmax.f32 %v703, %v704
        %v707 = vmax.f32 %v705, %v706
        %v708 = vrot.slane %v707, 4
        %v709 = vmax.f32 %v707, %v708
        %v710 = vrot.slane %v709, 2
        %v711 = vmax.f32 %v709, %v710
        %v712 = vrot.slane %v711, 1
        %v713 = vmax.f32 %v711, %v712
        %v714 = vsub.f32 %v654, %v713
        %v715 = vsub.f32 %v656, %v713
        %v716 = vsub.f32 %v659, %v713
        %v717 = vsub.f32 %v661, %v713
        %v718 = vsub.f32 %v664, %v713
        %v719 = vsub.f32 %v666, %v713
        %v720 = vsub.f32 %v669, %v713
        %v721 = vsub.f32 %v671, %v713
        %v722 = vsub.f32 %v674, %v713
        %v723 = vsub.f32 %v676, %v713
        %v724 = vsub.f32 %v679, %v713
        %v725 = vsub.f32 %v681, %v713
        %v726 = vsub.f32 %v684, %v713
        %v727 = vsub.f32 %v686, %v713
        %v728 = vsub.f32 %v689, %v713
        %v729 = vsub.f32 %v691, %v713
        %v730 = vmul.f32 %v714, 1.442695
        %v731 = vpow.pop %v730
        %v732 = vmul.f32 %v715, 1.442695
        %v733 = vpow.pop %v732
        %v734 = vmul.f32 %v716, 1.442695
        %v735 = vpow.pop %v734
        %v736 = vmul.f32 %v717, 1.442695
        %v737 = vpow.pop %v736
        %v738 = vmul.f32 %v718, 1.442695
        %v739 = vpow.pop %v738
        %v740 = vmul.f32 %v719, 1.442695
        %v741 = vpow.pop %v740
        %v742 = vmul.f32 %v720, 1.442695
        %v743 = vpow.pop %v742
        %v744 = vmul.f32 %v721, 1.442695
        %v745 = vpow.pop %v744
        %v746 = vmul.f32 %v722, 1.442695
        %v747 = vpow.pop %v746
        %v748 = vmul.f32 %v723, 1.442695
        %v749 = vpow.pop %v748
        %v750 = vmul.f32 %v724, 1.442695
        %v751 = vpow.pop %v750
        %v752 = vmul.f32 %v725, 1.442695
        %v753 = vpow.pop %v752
        %v754 = vmul.f32 %v726, 1.442695
        %v755 = vpow.pop %v754
        %v756 = vmul.f32 %v727, 1.442695
        %v757 = vpow.pop %v756
        %v758 = vmul.f32 %v728, 1.442695
        %v759 = vpow.pop %v758
        %v760 = vmul.f32 %v729, 1.442695
        %v761 = vpow.pop %v760
        %v762 = vadd.f32 %v731, %v733
        %v763 = vadd.f32 %v762, %v735
        %v764 = vadd.f32 %v763, %v737
        %v765 = vadd.f32 %v764, %v739
        %v766 = vadd.f32 %v765, %v741
        %v767 = vadd.f32 %v766, %v743
        %v768 = vadd.f32 %v767, %v745
        %v769 = vadd.f32 %v768, %v747
        %v770 = vadd.f32 %v769, %v749
        %v771 = vadd.f32 %v770, %v751
        %v772 = vadd.f32 %v771, %v753
        %v773 = vadd.f32 %v772, %v755
        %v774 = vadd.f32 %v773, %v757
        %v775 = vadd.f32 %v774, %v759
        %v776 = vadd.f32 %v775, %v761
        %v777 = vrot.slane %v776, 4
        %v778 = vadd.f32 %v776, %v777
        %v779 = vrot.slane %v778, 2
        %v780 = vadd.f32 %v778, %v779
        %v781 = vrot.slane %v780, 1
        %v782 = vadd.f32 %v780, %v781
        %v783 = vpack.c.bf16 %v733, %v731
        %v784 = vpack.c.bf16 %v737, %v735
        %v785 = vpack.c.bf16 %v741, %v739
        %v786 = vpack.c.bf16 %v745, %v743
        %v787 = vpack.c.bf16 %v749, %v747
        %v788 = vpack.c.bf16 %v753, %v751
        %v789 = vpack.c.bf16 %v757, %v755
        %v790 = vpack.c.bf16 %v761, %v759
        %v792 = vunpack.c.l.b16 %v591
        %v793 = vpack.c.b16 %v792, %v792
        %v794 = vrot.slane %v793, 2
        %796 = vmatpush.bf16.msra.mxu0 %v790
        %797 = vmatpush.bf16.msra.mxu0 %v789
        %798 = vmatpush.bf16.msra.mxu0 %v788
        %799 = vmatpush.bf16.msra.mxu0 %v787
        %800 = vmatpush.bf16.msra.mxu0 %v786
        %801 = vmatpush.bf16.msra.mxu0 %v785
        %802 = vmatpush.bf16.msra.mxu0 %v784
        %803 = vmatpush.bf16.msra.mxu0 %v783
        %804 = vmatmul.bf16.gmra.mxu0 %v794
        %v805 = vpop.f32.mrf.mxu0
        %v806 = vadd.f32 0.0, %v805
        %v807 = vpop.f32.mrf.mxu0
        %808 = vdwg.mxu0
        %v809 = vrcp.pop %v782
        %v810 = vmul.f32 %v806, %v809
        %v811 = vpack.c.bf16 %v810, %v810
        %v813 = vrot.slane %v811, 6
        %815 = vst [vmem:[%s215] sm:$0xc] %v813
        %v816 = vld [vmem:[#allocation2 + $0x4] sm:$0x3]
        %v817 = vld [vmem:[#allocation2 + $0xc] sm:$0x3]
        %v818 = vld [vmem:[#allocation2 + $0x14] sm:$0x3]
        %819 = vxpose.xlu0.c.b16.start [1/8] %v817, 128
        %820 = vxpose.xlu0.c.b16.cont [2/8] 0, 128
        %821 = vxpose.xlu0.c.b16.cont [3/8] 0, 128
        %822 = vxpose.xlu0.c.b16.cont [4/8] 0, 128
        %823 = vxpose.xlu0.c.b16.cont [5/8] 0, 128
        %824 = vxpose.xlu0.c.b16.cont [6/8] 0, 128
        %825 = vxpose.xlu0.c.b16.cont [7/8] 0, 128
        %826 = vxpose.xlu0.c.b16.end [8/8] 0, 128
        %v827 = vpop.trf.xlu0
        %v828 = vpop.trf.xlu0
        %v829 = vpop.trf.xlu0
        %v830 = vpop.trf.xlu0
        %v831 = vpop.trf.xlu0
        %v832 = vpop.trf.xlu0
        %v833 = vpop.trf.xlu0
        %v834 = vpop.trf.xlu0
        %v836 = vsel %vm396, %v827, 0
        %v839 = vsel %vm396, %v828, 0
        %v842 = vsel %vm396, %v829, 0
        %v845 = vsel %vm396, %v830, 0
        %v848 = vsel %vm396, %v831, 0
        %v851 = vsel %vm396, %v832, 0
        %v854 = vsel %vm396, %v833, 0
        %v857 = vsel %vm396, %v834, 0
        %v860 = vsel %vm421, %v816, 0
        %862 = vmatpush.bf16.msra.mxu0 0
        %863 = vmatpush.bf16.msra.mxu0 0
        %864 = vmatpush.bf16.msra.mxu0 0
        %865 = vmatpush.bf16.msra.mxu0 0
        %866 = vmatpush.bf16.msra.mxu0 0
        %867 = vmatpush.bf16.msra.mxu0 0
        %868 = vmatpush.bf16.msra.mxu0 0
        %869 = vmatpush.bf16.msra.mxu0 %v860
        %870 = vmatmul.bf16.gmra.mxu0 %v836
        %v871 = vpop.f32.mrf.mxu0
        %v872 = vadd.f32 %v361, %v871
        %v873 = vpop.f32.mrf.mxu0
        %v874 = vadd.f32 %v362, %v873
        %875 = vmatmul.bf16.gmra.mxu0 %v839
        %v876 = vpop.f32.mrf.mxu0
        %v877 = vadd.f32 %v363, %v876
        %v878 = vpop.f32.mrf.mxu0
        %v879 = vadd.f32 %v364, %v878
        %880 = vmatmul.bf16.gmra.mxu0 %v842
        %v881 = vpop.f32.mrf.mxu0
        %v882 = vadd.f32 %v365, %v881
        %v883 = vpop.f32.mrf.mxu0
        %v884 = vadd.f32 %v366, %v883
        %885 = vmatmul.bf16.gmra.mxu0 %v845
        %v886 = vpop.f32.mrf.mxu0
        %v887 = vadd.f32 %v367, %v886
        %v888 = vpop.f32.mrf.mxu0
        %v889 = vadd.f32 %v368, %v888
        %890 = vmatmul.bf16.gmra.mxu0 %v848
        %v891 = vpop.f32.mrf.mxu0
        %v892 = vadd.f32 %v369, %v891
        %v893 = vpop.f32.mrf.mxu0
        %v894 = vadd.f32 %v370, %v893
        %895 = vmatmul.bf16.gmra.mxu0 %v851
        %v896 = vpop.f32.mrf.mxu0
        %v897 = vadd.f32 %v371, %v896
        %v898 = vpop.f32.mrf.mxu0
        %v899 = vadd.f32 %v372, %v898
        %900 = vmatmul.bf16.gmra.mxu0 %v854
        %v901 = vpop.f32.mrf.mxu0
        %v902 = vadd.f32 %v373, %v901
        %v903 = vpop.f32.mrf.mxu0
        %v904 = vadd.f32 %v374, %v903
        %905 = vmatmul.bf16.gmra.mxu0 %v857
        %v906 = vpop.f32.mrf.mxu0
        %v907 = vadd.f32 %v375, %v906
        %v908 = vpop.f32.mrf.mxu0
        %v909 = vadd.f32 %v376, %v908
        %910 = vdwg.mxu0
        %v911 = vmax.f32 %v872, %v882
        %v912 = vmax.f32 %v874, %v884
        %v913 = vmax.f32 %v877, %v887
        %v914 = vmax.f32 %v879, %v889
        %v915 = vmax.f32 %v911, %v892
        %v916 = vmax.f32 %v912, %v894
        %v917 = vmax.f32 %v913, %v897
        %v918 = vmax.f32 %v914, %v899
        %v919 = vmax.f32 %v915, %v902
        %v920 = vmax.f32 %v916, %v904
        %v921 = vmax.f32 %v917, %v907
        %v922 = vmax.f32 %v918, %v909
        %v923 = vmax.f32 %v919, %v920
        %v924 = vmax.f32 %v921, %v922
        %v925 = vmax.f32 %v923, %v924
        %v926 = vrot.slane %v925, 4
        %v927 = vmax.f32 %v925, %v926
        %v928 = vrot.slane %v927, 2
        %v929 = vmax.f32 %v927, %v928
        %v930 = vrot.slane %v929, 1
        %v931 = vmax.f32 %v929, %v930
        %v932 = vsub.f32 %v872, %v931
        %v933 = vsub.f32 %v874, %v931
        %v934 = vsub.f32 %v877, %v931
        %v935 = vsub.f32 %v879, %v931
        %v936 = vsub.f32 %v882, %v931
        %v937 = vsub.f32 %v884, %v931
        %v938 = vsub.f32 %v887, %v931
        %v939 = vsub.f32 %v889, %v931
        %v940 = vsub.f32 %v892, %v931
        %v941 = vsub.f32 %v894, %v931
        %v942 = vsub.f32 %v897, %v931
        %v943 = vsub.f32 %v899, %v931
        %v944 = vsub.f32 %v902, %v931
        %v945 = vsub.f32 %v904, %v931
        %v946 = vsub.f32 %v907, %v931
        %v947 = vsub.f32 %v909, %v931
        %v948 = vmul.f32 %v932, 1.442695
        %v949 = vpow.pop %v948
        %v950 = vmul.f32 %v933, 1.442695
        %v951 = vpow.pop %v950
        %v952 = vmul.f32 %v934, 1.442695
        %v953 = vpow.pop %v952
        %v954 = vmul.f32 %v935, 1.442695
        %v955 = vpow.pop %v954
        %v956 = vmul.f32 %v936, 1.442695
        %v957 = vpow.pop %v956
        %v958 = vmul.f32 %v937, 1.442695
        %v959 = vpow.pop %v958
        %v960 = vmul.f32 %v938, 1.442695
        %v961 = vpow.pop %v960
        %v962 = vmul.f32 %v939, 1.442695
        %v963 = vpow.pop %v962
        %v964 = vmul.f32 %v940, 1.442695
        %v965 = vpow.pop %v964
        %v966 = vmul.f32 %v941, 1.442695
        %v967 = vpow.pop %v966
        %v968 = vmul.f32 %v942, 1.442695
        %v969 = vpow.pop %v968
        %v970 = vmul.f32 %v943, 1.442695
        %v971 = vpow.pop %v970
        %v972 = vmul.f32 %v944, 1.442695
        %v973 = vpow.pop %v972
        %v974 = vmul.f32 %v945, 1.442695
        %v975 = vpow.pop %v974
        %v976 = vmul.f32 %v946, 1.442695
        %v977 = vpow.pop %v976
        %v978 = vmul.f32 %v947, 1.442695
        %v979 = vpow.pop %v978
        %v980 = vadd.f32 %v949, %v951
        %v981 = vadd.f32 %v980, %v953
        %v982 = vadd.f32 %v981, %v955
        %v983 = vadd.f32 %v982, %v957
        %v984 = vadd.f32 %v983, %v959
        %v985 = vadd.f32 %v984, %v961
        %v986 = vadd.f32 %v985, %v963
        %v987 = vadd.f32 %v986, %v965
        %v988 = vadd.f32 %v987, %v967
        %v989 = vadd.f32 %v988, %v969
        %v990 = vadd.f32 %v989, %v971
        %v991 = vadd.f32 %v990, %v973
        %v992 = vadd.f32 %v991, %v975
        %v993 = vadd.f32 %v992, %v977
        %v994 = vadd.f32 %v993, %v979
        %v995 = vrot.slane %v994, 4
        %v996 = vadd.f32 %v994, %v995
        %v997 = vrot.slane %v996, 2
        %v998 = vadd.f32 %v996, %v997
        %v999 = vrot.slane %v998, 1
        %v1000 = vadd.f32 %v998, %v999
        %v1001 = vpack.c.bf16 %v951, %v949
        %v1002 = vpack.c.bf16 %v955, %v953
        %v1003 = vpack.c.bf16 %v959, %v957
        %v1004 = vpack.c.bf16 %v963, %v961
        %v1005 = vpack.c.bf16 %v967, %v965
        %v1006 = vpack.c.bf16 %v971, %v969
        %v1007 = vpack.c.bf16 %v975, %v973
        %v1008 = vpack.c.bf16 %v979, %v977
        %1009 = vmatpush.bf16.msra.mxu0 %v1008
        %1010 = vmatpush.bf16.msra.mxu0 %v1007
        %1011 = vmatpush.bf16.msra.mxu0 %v1006
        %1012 = vmatpush.bf16.msra.mxu0 %v1005
        %1013 = vmatpush.bf16.msra.mxu0 %v1004
        %1014 = vmatpush.bf16.msra.mxu0 %v1003
        %1015 = vmatpush.bf16.msra.mxu0 %v1002
        %1016 = vmatpush.bf16.msra.mxu0 %v1001
        %1017 = vmatmul.bf16.gmra.mxu0 %v818
        %v1018 = vpop.f32.mrf.mxu0
        %v1019 = vadd.f32 0.0, %v1018
        %v1020 = vpop.f32.mrf.mxu0
        %1021 = vdwg.mxu0
        %v1022 = vrcp.pop %v1000
        %v1023 = vmul.f32 %v1019, %v1022
        %v1024 = vpack.c.bf16 %v1023, %v1023
        %1025 = vst [vmem:[%s215 + $0x4] sm:$0x3] %v1024
        %v1026 = vld [vmem:[#allocation2 + $0x4] sm:$0xc]
        %v1027 = vld [vmem:[#allocation2 + $0xc] sm:$0xc]
        %v1028 = vld [vmem:[#allocation2 + $0x14] sm:$0xc]
        %v1030 = vunpack.c.l.b16 %v1027
        %v1031 = vpack.c.b16 %v1030, %v1030
        %v1032 = vrot.slane %v1031, 2
        %1034 = vxpose.xlu0.c.b16.start [1/8] %v1032, 128
        %1035 = vxpose.xlu0.c.b16.cont [2/8] 0, 128
        %1036 = vxpose.xlu0.c.b16.cont [3/8] 0, 128
        %1037 = vxpose.xlu0.c.b16.cont [4/8] 0, 128
        %1038 = vxpose.xlu0.c.b16.cont [5/8] 0, 128
        %1039 = vxpose.xlu0.c.b16.cont [6/8] 0, 128
        %1040 = vxpose.xlu0.c.b16.cont [7/8] 0, 128
        %1041 = vxpose.xlu0.c.b16.end [8/8] 0, 128
        %v1042 = vpop.trf.xlu0
        %v1043 = vpop.trf.xlu0
        %v1044 = vpop.trf.xlu0
        %v1045 = vpop.trf.xlu0
        %v1046 = vpop.trf.xlu0
        %v1047 = vpop.trf.xlu0
        %v1048 = vpop.trf.xlu0
        %v1049 = vpop.trf.xlu0
        %v1051 = vunpack.c.l.b16 %v1026
        %v1052 = vpack.c.b16 %v1051, %v1051
        %v1053 = vrot.slane %v1052, 2
        %v1055 = vsel %vm396, %v1042, 0
        %v1058 = vsel %vm396, %v1043, 0
        %v1061 = vsel %vm396, %v1044, 0
        %v1064 = vsel %vm396, %v1045, 0
        %v1067 = vsel %vm396, %v1046, 0
        %v1070 = vsel %vm396, %v1047, 0
        %v1073 = vsel %vm396, %v1048, 0
        %v1076 = vsel %vm396, %v1049, 0
        %v1079 = vsel %vm421, %v1053, 0
        %1081 = vmatpush.bf16.msra.mxu0 0
        %1082 = vmatpush.bf16.msra.mxu0 0
        %1083 = vmatpush.bf16.msra.mxu0 0
        %1084 = vmatpush.bf16.msra.mxu0 0
        %1085 = vmatpush.bf16.msra.mxu0 0
        %1086 = vmatpush.bf16.msra.mxu0 0
        %1087 = vmatpush.bf16.msra.mxu0 0
        %1088 = vmatpush.bf16.msra.mxu0 %v1079
        %1089 = vmatmul.bf16.gmra.mxu0 %v1055
        %v1090 = vpop.f32.mrf.mxu0
        %v1091 = vadd.f32 %v361, %v1090
        %v1092 = vpop.f32.mrf.mxu0
        %v1093 = vadd.f32 %v362, %v1092
        %1094 = vmatmul.bf16.gmra.mxu0 %v1058
        %v1095 = vpop.f32.mrf.mxu0
        %v1096 = vadd.f32 %v363, %v1095
        %v1097 = vpop.f32.mrf.mxu0
        %v1098 = vadd.f32 %v364, %v1097
        %1099 = vmatmul.bf16.gmra.mxu0 %v1061
        %v1100 = vpop.f32.mrf.mxu0
        %v1101 = vadd.f32 %v365, %v1100
        %v1102 = vpop.f32.mrf.mxu0
        %v1103 = vadd.f32 %v366, %v1102
        %1104 = vmatmul.bf16.gmra.mxu0 %v1064
        %v1105 = vpop.f32.mrf.mxu0
        %v1106 = vadd.f32 %v367, %v1105
        %v1107 = vpop.f32.mrf.mxu0
        %v1108 = vadd.f32 %v368, %v1107
        %1109 = vmatmul.bf16.gmra.mxu0 %v1067
        %v1110 = vpop.f32.mrf.mxu0
        %v1111 = vadd.f32 %v369, %v1110
        %v1112 = vpop.f32.mrf.mxu0
        %v1113 = vadd.f32 %v370, %v1112
        %1114 = vmatmul.bf16.gmra.mxu0 %v1070
        %v1115 = vpop.f32.mrf.mxu0
        %v1116 = vadd.f32 %v371, %v1115
        %v1117 = vpop.f32.mrf.mxu0
        %v1118 = vadd.f32 %v372, %v1117
        %1119 = vmatmul.bf16.gmra.mxu0 %v1073
        %v1120 = vpop.f32.mrf.mxu0
        %v1121 = vadd.f32 %v373, %v1120
        %v1122 = vpop.f32.mrf.mxu0
        %v1123 = vadd.f32 %v374, %v1122
        %1124 = vmatmul.bf16.gmra.mxu0 %v1076
        %v1125 = vpop.f32.mrf.mxu0
        %v1126 = vadd.f32 %v375, %v1125
        %v1127 = vpop.f32.mrf.mxu0
        %v1128 = vadd.f32 %v376, %v1127
        %1129 = vdwg.mxu0
        %v1130 = vmax.f32 %v1091, %v1101
        %v1131 = vmax.f32 %v1093, %v1103
        %v1132 = vmax.f32 %v1096, %v1106
        %v1133 = vmax.f32 %v1098, %v1108
        %v1134 = vmax.f32 %v1130, %v1111
        %v1135 = vmax.f32 %v1131, %v1113
        %v1136 = vmax.f32 %v1132, %v1116
        %v1137 = vmax.f32 %v1133, %v1118
        %v1138 = vmax.f32 %v1134, %v1121
        %v1139 = vmax.f32 %v1135, %v1123
        %v1140 = vmax.f32 %v1136, %v1126
        %v1141 = vmax.f32 %v1137, %v1128
        %v1142 = vmax.f32 %v1138, %v1139
        %v1143 = vmax.f32 %v1140, %v1141
        %v1144 = vmax.f32 %v1142, %v1143
        %v1145 = vrot.slane %v1144, 4
        %v1146 = vmax.f32 %v1144, %v1145
        %v1147 = vrot.slane %v1146, 2
        %v1148 = vmax.f32 %v1146, %v1147
        %v1149 = vrot.slane %v1148, 1
        %v1150 = vmax.f32 %v1148, %v1149
        %v1151 = vsub.f32 %v1091, %v1150
        %v1152 = vsub.f32 %v1093, %v1150
        %v1153 = vsub.f32 %v1096, %v1150
        %v1154 = vsub.f32 %v1098, %v1150
        %v1155 = vsub.f32 %v1101, %v1150
        %v1156 = vsub.f32 %v1103, %v1150
        %v1157 = vsub.f32 %v1106, %v1150
        %v1158 = vsub.f32 %v1108, %v1150
        %v1159 = vsub.f32 %v1111, %v1150
        %v1160 = vsub.f32 %v1113, %v1150
        %v1161 = vsub.f32 %v1116, %v1150
        %v1162 = vsub.f32 %v1118, %v1150
        %v1163 = vsub.f32 %v1121, %v1150
        %v1164 = vsub.f32 %v1123, %v1150
        %v1165 = vsub.f32 %v1126, %v1150
        %v1166 = vsub.f32 %v1128, %v1150
        %v1167 = vmul.f32 %v1151, 1.442695
        %v1168 = vpow.pop %v1167
        %v1169 = vmul.f32 %v1152, 1.442695
        %v1170 = vpow.pop %v1169
        %v1171 = vmul.f32 %v1153, 1.442695
        %v1172 = vpow.pop %v1171
        %v1173 = vmul.f32 %v1154, 1.442695
        %v1174 = vpow.pop %v1173
        %v1175 = vmul.f32 %v1155, 1.442695
        %v1176 = vpow.pop %v1175
        %v1177 = vmul.f32 %v1156, 1.442695
        %v1178 = vpow.pop %v1177
        %v1179 = vmul.f32 %v1157, 1.442695
        %v1180 = vpow.pop %v1179
        %v1181 = vmul.f32 %v1158, 1.442695
        %v1182 = vpow.pop %v1181
        %v1183 = vmul.f32 %v1159, 1.442695
        %v1184 = vpow.pop %v1183
        %v1185 = vmul.f32 %v1160, 1.442695
        %v1186 = vpow.pop %v1185
        %v1187 = vmul.f32 %v1161, 1.442695
        %v1188 = vpow.pop %v1187
        %v1189 = vmul.f32 %v1162, 1.442695
        %v1190 = vpow.pop %v1189
        %v1191 = vmul.f32 %v1163, 1.442695
        %v1192 = vpow.pop %v1191
        %v1193 = vmul.f32 %v1164, 1.442695
        %v1194 = vpow.pop %v1193
        %v1195 = vmul.f32 %v1165, 1.442695
        %v1196 = vpow.pop %v1195
        %v1197 = vmul.f32 %v1166, 1.442695
        %v1198 = vpow.pop %v1197
        %v1199 = vadd.f32 %v1168, %v1170
        %v1200 = vadd.f32 %v1199, %v1172
        %v1201 = vadd.f32 %v1200, %v1174
        %v1202 = vadd.f32 %v1201, %v1176
        %v1203 = vadd.f32 %v1202, %v1178
        %v1204 = vadd.f32 %v1203, %v1180
        %v1205 = vadd.f32 %v1204, %v1182
        %v1206 = vadd.f32 %v1205, %v1184
        %v1207 = vadd.f32 %v1206, %v1186
        %v1208 = vadd.f32 %v1207, %v1188
        %v1209 = vadd.f32 %v1208, %v1190
        %v1210 = vadd.f32 %v1209, %v1192
        %v1211 = vadd.f32 %v1210, %v1194
        %v1212 = vadd.f32 %v1211, %v1196
        %v1213 = vadd.f32 %v1212, %v1198
        %v1214 = vrot.slane %v1213, 4
        %v1215 = vadd.f32 %v1213, %v1214
        %v1216 = vrot.slane %v1215, 2
        %v1217 = vadd.f32 %v1215, %v1216
        %v1218 = vrot.slane %v1217, 1
        %v1219 = vadd.f32 %v1217, %v1218
        %v1220 = vpack.c.bf16 %v1170, %v1168
        %v1221 = vpack.c.bf16 %v1174, %v1172
        %v1222 = vpack.c.bf16 %v1178, %v1176
        %v1223 = vpack.c.bf16 %v1182, %v1180
        %v1224 = vpack.c.bf16 %v1186, %v1184
        %v1225 = vpack.c.bf16 %v1190, %v1188
        %v1226 = vpack.c.bf16 %v1194, %v1192
        %v1227 = vpack.c.bf16 %v1198, %v1196
        %v1229 = vunpack.c.l.b16 %v1028
        %v1230 = vpack.c.b16 %v1229, %v1229
        %v1231 = vrot.slane %v1230, 2
        %1233 = vmatpush.bf16.msra.mxu0 %v1227
        %1234 = vmatpush.bf16.msra.mxu0 %v1226
        %1235 = vmatpush.bf16.msra.mxu0 %v1225
        %1236 = vmatpush.bf16.msra.mxu0 %v1224
        %1237 = vmatpush.bf16.msra.mxu0 %v1223
        %1238 = vmatpush.bf16.msra.mxu0 %v1222
        %1239 = vmatpush.bf16.msra.mxu0 %v1221
        %1240 = vmatpush.bf16.msra.mxu0 %v1220
        %1241 = vmatmul.bf16.gmra.mxu0 %v1231
        %v1242 = vpop.f32.mrf.mxu0
        %v1243 = vadd.f32 0.0, %v1242
        %v1244 = vpop.f32.mrf.mxu0
        %1245 = vdwg.mxu0
        %v1246 = vrcp.pop %v1219
        %v1247 = vmul.f32 %v1243, %v1246
        %v1248 = vpack.c.bf16 %v1247, %v1247
        %v1250 = vrot.slane %v1248, 6
        %1252 = vst [vmem:[%s215 + $0x4] sm:$0xc] %v1250
        %s1253 = sand.u32 %s93, 1
        %s1254 = scalar_lea.sflag [#allocation5], %s1253
        %s1255 = sand.u32 %s93, 1
        %s1256 = smul.addr %s1255, 8
        %s1257 = scalar_lea.vmem [#allocation4], %s1256
        // Predicated region
        $region74: #{tpu_custom_call.1} parent=68 // pred_check
          %p1258 = pneg %p103
        $region75: #{tpu_custom_call.1} parent=68 // pred_check_branch
          %1260 = sbr.rel (%p1258) target = $region77
        $region76: #{tpu_custom_call.1} parent=68 // pred_region
          %1262 = vsyncadd %s1254, 0
          %s1263 = smul.addr %s17, 4
          %s1264 = scalar_lea.hbm %s3, %s1263
          %s1265 = sshll.u32 %s1257, 4
          %s1266 = int_to_ptr.vmem [resolvable:$true] %s1265
          %s1267 = sshll.u32 %s1264, 4
          %s1268 = int_to_ptr.hbm [resolvable:$true] %s1267
          %1273 = dma.vmem_to_hbm [thread:$0]  %s1266, 128, %s1268, %s1254, 64, 128, 4
        $region77: #{tpu_custom_call.1} parent=68 // pred_fallthru
          _
      $region69: #{tpu_custom_call.1} parent=5 // pred_fallthru
        _
      %p1274 = scmp.le.s32.totalorder 2, %s12
      // Predicated region
      $region78: #{tpu_custom_call.1} parent=5 // pred_check
        %p1275 = pneg %p1274
      $region79: #{tpu_custom_call.1} parent=5 // pred_check_branch
        %1277 = sbr.rel (%p1275) target = $region81
      $region80: #{tpu_custom_call.1} parent=5 // pred_region
        %s1278 = ssub.s32 %s12, 2
        // Predicated region
        $region82: #{tpu_custom_call.1} parent=80 // pred_check
          %p1279 = pneg %p109
        $region83: #{tpu_custom_call.1} parent=80 // pred_check_branch
          %1281 = sbr.rel (%p1279) target = $region85
        $region84: #{tpu_custom_call.1} parent=80 // pred_region
          %s1282 = sand.u32 %s94, 1
          %s1283 = scalar_lea.sflag [#allocation5], %s1282
          %s1284 = sand.u32 %s94, 1
          %s1285 = smul.addr %s1284, 8
          %s1286 = scalar_lea.vmem [#allocation4], %s1285
          %1288 = dma.done %s1283, 128
        $region85: #{tpu_custom_call.1} parent=80 // pred_fallthru
          _
      $region81: #{tpu_custom_call.1} parent=5 // pred_fallthru
        _
    $region6: #{tpu_custom_call.1} parent=1 // loop_footer
      %s16 = sadd.s32 1, %s12
    $region7: #{tpu_custom_call.1} parent=1 // loop_footer_branch
      %11 = sbr.rel target = $region3
    $region8: #{tpu_custom_call.1} parent=1 // loop_exit
      _
    %1289 = vsyncpa [#allocation5], 1
    %s1290 = scalar_lea.sflag [#allocation5], 1
    %1291 = vsyncpa %s1290, 1

</llo_original>
